<compile_context>
chip_gen: v5e
topology: v5e:2x2
jax: 0.10.0
libtpu: 0.0.40
codegen_flags: <defaults>
</compile_context>

<pallas_src>
import jax
import jax.numpy as jnp
from jax.experimental import pallas as pl
from jax.experimental.pallas import tpu as pltpu

LSTM_H = 16
FC1_H = 16
IN_DIM = 721
IN_PAD = 768  # next multiple of 128 (x lanes 0:721, h0 lanes 721:737, rest 0)


def _drqn_kernel(x_ref, c0_ref, wx_ref, wfc_ref, b_ref,
                 h5_ref, hn_ref, cn_ref):
    c0 = c0_ref[...]                        # (B, 16)           f32
    b_all = b_ref[...]                      # (1, 64+16+NA)     f32

    # flat1 + LSTM input projection + recurrent projection, one bf16 MXU pass.
    gates = (
        jnp.dot(x_ref[...], wx_ref[...], preferred_element_type=jnp.float32)
        + b_all[:, :4 * LSTM_H]
    )                                       # (B, 64) f32

    # One transcendental pass. Gate column order is (i, f, o, g); the g
    # columns of w_x / b_x were pre-scaled by 2, so
    # tanh(z_g) = 2*sigmoid(2*z_g) - 1 costs one VALU fma, not a second EUP pass.
    act = jax.nn.sigmoid(gates)             # (B, 64)
    i_g = act[:, 0 * LSTM_H:1 * LSTM_H]
    f_g = act[:, 1 * LSTM_H:2 * LSTM_H]
    o_g = act[:, 2 * LSTM_H:3 * LSTM_H]
    g_g = 2.0 * act[:, 3 * LSTM_H:4 * LSTM_H] - 1.0

    c_new = f_g * c0 + i_g * g_g
    h_new = o_g * jnp.tanh(c_new)

    # fc1 -> relu -> fc2 (tiny f32 matmuls; weights packed lane-wise)
    wfc = wfc_ref[...]                      # (16, 16+NA) = [wfc1 | wfc2]
    h4 = jnp.maximum(
        jnp.dot(h_new, wfc[:, :FC1_H], preferred_element_type=jnp.float32)
        + b_all[:, 4 * LSTM_H:4 * LSTM_H + FC1_H],
        0.0,
    )
    h5 = (
        jnp.dot(h4, wfc[:, FC1_H:], preferred_element_type=jnp.float32)
        + b_all[:, 4 * LSTM_H + FC1_H:]
    )

    # Three full-ref stores: no concat / lane-shift assembly in the epilogue.
    h5_ref[...] = h5
    hn_ref[...] = h_new
    cn_ref[...] = c_new


def init_params(key, n_action):
    """PyTorch-convention params, stored transposed: (in_dim, out_dim).
    LSTM gate order along the 4*H axis is PyTorch's (i, f, g, o)."""
    ks = jax.random.split(key, 8)
    scale = 0.1
    return {
        "w1_t": jax.random.normal(ks[0], (IN_DIM, LSTM_H), jnp.float32) * scale,
        "b1": jax.random.normal(ks[1], (1, LSTM_H), jnp.float32) * scale,
        "wih_t": jax.random.normal(ks[2], (LSTM_H, 4 * LSTM_H), jnp.float32) * scale,
        "bih": jax.random.normal(ks[3], (1, 4 * LSTM_H), jnp.float32) * scale,
        "whh_t": jax.random.normal(ks[4], (LSTM_H, 4 * LSTM_H), jnp.float32) * scale,
        "bhh": jax.random.normal(ks[5], (1, 4 * LSTM_H), jnp.float32) * scale,
        "wfc1_t": jax.random.normal(ks[6], (LSTM_H, FC1_H), jnp.float32) * scale,
        "bfc1": jnp.zeros((1, FC1_H), jnp.float32),
        "wfc2_t": jax.random.normal(ks[7], (FC1_H, n_action), jnp.float32) * scale,
        "bfc2": jnp.zeros((1, n_action), jnp.float32),
    }


def fuse_params(params):
    """One-time precompute:
      * fold flat1 into the LSTM input projection (no nonlinearity between
        them in the original module, so this is exact up to f32 reassociation),
      * reorder gate columns (i,f,g,o) -> (i,f,o,g),
      * stack whh into the padded rows 721:737 of w_x (h0 rides in x's lanes),
      * pre-scale the g-gate columns by 2 (single-sigmoid-pass trick),
      * cast the big fused weight to bf16, pack the small params into two
        buffers."""
    perm = jnp.concatenate([
        jnp.arange(0, 2 * LSTM_H),           # i, f
        jnp.arange(3 * LSTM_H, 4 * LSTM_H),  # o
        jnp.arange(2 * LSTM_H, 3 * LSTM_H),  # g
    ])
    wih = params["wih_t"][:, perm]           # (16, 64)
    whh = params["whh_t"][:, perm]           # (16, 64)
    bih = params["bih"][:, perm]             # (1, 64)
    bhh = params["bhh"][:, perm]             # (1, 64)

    w_top = params["w1_t"] @ wih             # (721, 64)
    b_x = params["b1"] @ wih + bih + bhh     # (1, 64)

    w_x = jnp.zeros((IN_PAD, 4 * LSTM_H), jnp.float32)
    w_x = w_x.at[:IN_DIM].set(w_top)
    w_x = w_x.at[IN_DIM:IN_DIM + LSTM_H].set(whh)   # recurrent proj folded in

    # Pre-scale g-gate columns by 2 (exact in fp): tanh(z) = 2*sigmoid(2z) - 1.
    g_scale = jnp.concatenate(
        [jnp.ones((3 * LSTM_H,), jnp.float32), jnp.full((LSTM_H,), 2.0, jnp.float32)])
    w_x = w_x * g_scale[None, :]
    b_x = b_x * g_scale[None, :]

    wfc = jnp.concatenate([params["wfc1_t"], params["wfc2_t"]], axis=1)  # (16, 16+NA)
    b_all = jnp.concatenate([b_x, params["bfc1"], params["bfc2"]], axis=1)

    return {
        "w_x": w_x.astype(jnp.bfloat16),   # (768, 64) bf16 -> dominant DMA ~98 KB
        "wfc": wfc,                        # tiny, keep f32
        "b_all": b_all,                    # tiny, keep f32
    }


@jax.jit
def drqn_forward(x, hidden, fused):
    """x: (B, 721) f32; hidden: (h0, c0) each (1, B, 16).
    Returns (h5, (h_n, c_n)) with PyTorch axis conventions."""
    B = x.shape[0]
    n_action = fused["b_all"].shape[1] - 4 * LSTM_H - FC1_H
    h0 = hidden[0].reshape(B, LSTM_H)
    c0 = hidden[1].reshape(B, LSTM_H)

    # Pack [x | h0 | zeros] into a single bf16 operand: lanes 0:721 = x,
    # lanes 721:737 = h0, lanes 737:768 = 0 (matches zero rows of w_x).
    x_p = jnp.concatenate(
        [x, h0, jnp.zeros((B, IN_PAD - IN_DIM - LSTM_H), x.dtype)], axis=1
    ).astype(jnp.bfloat16)

    vmem = pl.BlockSpec(memory_space=pltpu.MemorySpace.VMEM)
    flops = (2 * B * IN_PAD * 4 * LSTM_H
             + 2 * B * LSTM_H * FC1_H
             + 2 * B * FC1_H * n_action
             + 10 * B * 4 * LSTM_H)
    bytes_accessed = (2 * (B * IN_PAD + IN_PAD * 4 * LSTM_H)          # bf16
                      + 4 * (B * LSTM_H                               # c0
                             + LSTM_H * (FC1_H + n_action)            # wfc
                             + (4 * LSTM_H + FC1_H + n_action)        # b_all
                             + B * (n_action + 2 * LSTM_H)))          # outputs

    h5, h_n, c_n = pl.pallas_call(
        _drqn_kernel,
        out_shape=(
            jax.ShapeDtypeStruct((B, n_action), jnp.float32),
            jax.ShapeDtypeStruct((B, LSTM_H), jnp.float32),
            jax.ShapeDtypeStruct((B, LSTM_H), jnp.float32),
        ),
        in_specs=[vmem] * 5,
        out_specs=(vmem, vmem, vmem),
        cost_estimate=pl.CostEstimate(
            flops=flops,
            transcendentals=B * (4 * LSTM_H + LSTM_H),
            bytes_accessed=bytes_accessed),
    )(x_p, c0, fused["w_x"], fused["wfc"], fused["b_all"])

    return (
        h5.reshape(1, B, n_action),
        (h_n.reshape(1, B, LSTM_H), c_n.reshape(1, B, LSTM_H)),
    )


def drqn_reference(x, hidden, params):
    """Pure-JAX f32 reference matching the original (unfused) PyTorch semantics."""
    B = x.shape[0]
    h0 = hidden[0].reshape(B, LSTM_H)
    c0 = hidden[1].reshape(B, LSTM_H)
    h2 = x @ params["w1_t"] + params["b1"]
    gates = h2 @ params["wih_t"] + params["bih"] + h0 @ params["whh_t"] + params["bhh"]
    i_g = jax.nn.sigmoid(gates[:, 0 * LSTM_H:1 * LSTM_H])
    f_g = jax.nn.sigmoid(gates[:, 1 * LSTM_H:2 * LSTM_H])
    g_g = jnp.tanh(gates[:, 2 * LSTM_H:3 * LSTM_H])
    o_g = jax.nn.sigmoid(gates[:, 3 * LSTM_H:4 * LSTM_H])
    c_n = f_g * c0 + i_g * g_g
    h_n = o_g * jnp.tanh(c_n)
    h4 = jnp.maximum(h_n @ params["wfc1_t"] + params["bfc1"], 0.0)
    h5 = h4 @ params["wfc2_t"] + params["bfc2"]
    n_action = params["wfc2_t"].shape[1]
    return (h5.reshape(1, B, n_action),
            (h_n.reshape(1, B, LSTM_H), c_n.reshape(1, B, LSTM_H)))


if __name__ == "__main__":
    N_ACTION = 8
    B = 2

    key = jax.random.PRNGKey(0)
    k_x, k_h, k_c, k_p = jax.random.split(key, 4)

    x = jax.random.normal(k_x, (B, IN_DIM), jnp.float32)
    h0 = jax.random.normal(k_h, (1, B, LSTM_H), jnp.float32)
    c0 = jax.random.normal(k_c, (1, B, LSTM_H), jnp.float32)
    params = init_params(k_p, N_ACTION)
    fused = fuse_params(params)

    h5, (h_n, c_n) = drqn_forward(x, (h0, c0), fused)
    jax.block_until_ready((h5, h_n, c_n))

    # Sanity check vs. the unfused f32 reference.  The kernel stores x/w_x in
    # bf16 (accumulation in f32), so tolerance covers bf16 rounding plus the
    # f32 reassociation from the weight fusion.
    h5_ref, (h_n_ref, c_n_ref) = drqn_reference(x, (h0, c0), params)
    assert h5.shape == (1, B, N_ACTION)
    assert h_n.shape == (1, B, LSTM_H) and c_n.shape == (1, B, LSTM_H)
    assert jnp.allclose(h5, h5_ref, atol=5e-2, rtol=5e-2)
    assert jnp.allclose(h_n, h_n_ref, atol=5e-2, rtol=5e-2)
    assert jnp.allclose(c_n, c_n_ref, atol=5e-2, rtol=5e-2)

    print("KERNEL_OK")
</pallas_src>

<mosaic_0001>
module attributes {stable_mosaic.version = 11 : i64} {
  func.func @_drqn_kernel(%arg0: memref<2x768xbf16, #tpu.memory_space<vmem>>, %arg1: memref<2x16xf32, #tpu.memory_space<vmem>>, %arg2: memref<768x64xbf16, #tpu.memory_space<vmem>>, %arg3: memref<16x24xf32, #tpu.memory_space<vmem>>, %arg4: memref<1x88xf32, #tpu.memory_space<vmem>>, %arg5: memref<2x8xf32, #tpu.memory_space<vmem>>, %arg6: memref<2x16xf32, #tpu.memory_space<vmem>>, %arg7: memref<2x16xf32, #tpu.memory_space<vmem>>) attributes {dimension_semantics = [], scalar_prefetch = 0 : i64, scratch_operands = 0 : i64, tpu.core_type = #tpu.core_type<tc>} {
    %c0 = arith.constant 0 : index
    %c0_0 = arith.constant 0 : index
    %0 = vector.load %arg1[%c0, %c0_0] : memref<2x16xf32, #tpu.memory_space<vmem>>, vector<2x16xf32>
    %c0_1 = arith.constant 0 : index
    %c0_2 = arith.constant 0 : index
    %1 = vector.load %arg4[%c0_1, %c0_2] : memref<1x88xf32, #tpu.memory_space<vmem>>, vector<1x88xf32>
    %c0_3 = arith.constant 0 : index
    %c0_4 = arith.constant 0 : index
    %2 = vector.load %arg0[%c0_3, %c0_4] : memref<2x768xbf16, #tpu.memory_space<vmem>>, vector<2x768xbf16>
    %c0_5 = arith.constant 0 : index
    %c0_6 = arith.constant 0 : index
    %3 = vector.load %arg2[%c0_5, %c0_6] : memref<768x64xbf16, #tpu.memory_space<vmem>>, vector<768x64xbf16>
    %cst = arith.constant dense<0.000000e+00> : vector<2x64xf32>
    %4 = tpu.matmul %2, %3, %cst {dimension_numbers = #tpu.dot_dimension_numbers<[1], [0], [0], [1], [0, 0, 1, 1], [], []>} : vector<2x768xbf16>, vector<768x64xbf16>, vector<2x64xf32> -> vector<2x64xf32>
    %5 = vector.extract_strided_slice %1 {offsets = [0, 0], sizes = [1, 64], strides = [1, 1]} : vector<1x88xf32> to vector<1x64xf32>
    %6 = vector.broadcast %5 : vector<1x64xf32> to vector<2x64xf32>
    %7 = arith.addf %4, %6 : vector<2x64xf32>
    %8 = arith.negf %7 : vector<2x64xf32>
    %9 = math.exp %8 : vector<2x64xf32>
    %cst_7 = arith.constant 1.000000e+00 : f32
    %10 = vector.broadcast %cst_7 : f32 to vector<2x64xf32>
    %11 = arith.addf %10, %9 : vector<2x64xf32>
    %12 = arith.divf %10, %11 : vector<2x64xf32>
    %13 = vector.extract_strided_slice %12 {offsets = [0, 0], sizes = [2, 16], strides = [1, 1]} : vector<2x64xf32> to vector<2x16xf32>
    %14 = vector.extract_strided_slice %12 {offsets = [0, 16], sizes = [2, 16], strides = [1, 1]} : vector<2x64xf32> to vector<2x16xf32>
    %15 = vector.extract_strided_slice %12 {offsets = [0, 32], sizes = [2, 16], strides = [1, 1]} : vector<2x64xf32> to vector<2x16xf32>
    %16 = vector.extract_strided_slice %12 {offsets = [0, 48], sizes = [2, 16], strides = [1, 1]} : vector<2x64xf32> to vector<2x16xf32>
    %cst_8 = arith.constant 2.000000e+00 : f32
    %17 = vector.broadcast %cst_8 : f32 to vector<2x16xf32>
    %18 = arith.mulf %17, %16 : vector<2x16xf32>
    %cst_9 = arith.constant 1.000000e+00 : f32
    %19 = vector.broadcast %cst_9 : f32 to vector<2x16xf32>
    %20 = arith.subf %18, %19 : vector<2x16xf32>
    %21 = arith.mulf %14, %0 : vector<2x16xf32>
    %22 = arith.mulf %13, %20 : vector<2x16xf32>
    %23 = arith.addf %21, %22 : vector<2x16xf32>
    %24 = math.tanh %23 : vector<2x16xf32>
    %25 = arith.mulf %15, %24 : vector<2x16xf32>
    %c0_10 = arith.constant 0 : index
    %c0_11 = arith.constant 0 : index
    %26 = vector.load %arg3[%c0_10, %c0_11] : memref<16x24xf32, #tpu.memory_space<vmem>>, vector<16x24xf32>
    %27 = vector.extract_strided_slice %26 {offsets = [0, 0], sizes = [16, 16], strides = [1, 1]} : vector<16x24xf32> to vector<16x16xf32>
    %cst_12 = arith.constant dense<0.000000e+00> : vector<2x16xf32>
    %28 = tpu.matmul %25, %27, %cst_12 {dimension_numbers = #tpu.dot_dimension_numbers<[1], [0], [0], [1], [0, 0, 1, 1], [], []>} : vector<2x16xf32>, vector<16x16xf32>, vector<2x16xf32> -> vector<2x16xf32>
    %29 = vector.extract_strided_slice %1 {offsets = [0, 64], sizes = [1, 16], strides = [1, 1]} : vector<1x88xf32> to vector<1x16xf32>
    %30 = vector.broadcast %29 : vector<1x16xf32> to vector<2x16xf32>
    %31 = arith.addf %28, %30 : vector<2x16xf32>
    %cst_13 = arith.constant 0.000000e+00 : f32
    %32 = vector.broadcast %cst_13 : f32 to vector<2x16xf32>
    %33 = arith.maximumf %31, %32 : vector<2x16xf32>
    %34 = vector.extract_strided_slice %26 {offsets = [0, 16], sizes = [16, 8], strides = [1, 1]} : vector<16x24xf32> to vector<16x8xf32>
    %cst_14 = arith.constant dense<0.000000e+00> : vector<2x8xf32>
    %35 = tpu.matmul %33, %34, %cst_14 {dimension_numbers = #tpu.dot_dimension_numbers<[1], [0], [0], [1], [0, 0, 1, 1], [], []>} : vector<2x16xf32>, vector<16x8xf32>, vector<2x8xf32> -> vector<2x8xf32>
    %36 = vector.extract_strided_slice %1 {offsets = [0, 80], sizes = [1, 8], strides = [1, 1]} : vector<1x88xf32> to vector<1x8xf32>
    %37 = vector.broadcast %36 : vector<1x8xf32> to vector<2x8xf32>
    %38 = arith.addf %35, %37 : vector<2x8xf32>
    %c0_15 = arith.constant 0 : index
    %c0_16 = arith.constant 0 : index
    %39 = vector.load %arg5[%c0_15, %c0_16] : memref<2x8xf32, #tpu.memory_space<vmem>>, vector<2x8xf32>
    tpu.vector_store %arg5[%c0_15, %c0_16], %38 {strides = array<i32>} : memref<2x8xf32, #tpu.memory_space<vmem>>, vector<2x8xf32>,
    %c0_17 = arith.constant 0 : index
    %c0_18 = arith.constant 0 : index
    %40 = vector.load %arg6[%c0_17, %c0_18] : memref<2x16xf32, #tpu.memory_space<vmem>>, vector<2x16xf32>
    tpu.vector_store %arg6[%c0_17, %c0_18], %25 {strides = array<i32>} : memref<2x16xf32, #tpu.memory_space<vmem>>, vector<2x16xf32>,
    %c0_19 = arith.constant 0 : index
    %c0_20 = arith.constant 0 : index
    %41 = vector.load %arg7[%c0_19, %c0_20] : memref<2x16xf32, #tpu.memory_space<vmem>>, vector<2x16xf32>
    tpu.vector_store %arg7[%c0_19, %c0_20], %23 {strides = array<i32>} : memref<2x16xf32, #tpu.memory_space<vmem>>, vector<2x16xf32>,
    return
  }
}

</mosaic_0001>

<llo_original>
// kernel: drqn_forward.1
$region0: #{drqn_forward.1}
  #allocation0 [shape = 'u32[]', space=smem, size = 0x4, offset = 0x4, fixed_abs, tag = 'smem constant byte address 0x4 - core index']
  #allocation1 [shape = 'u32[72,128]{1,0:T(1,128)}', space=vmem, size = 0x9000, scoped, tag = 'internal scratch']
  %s0 = inlined_call_operand.vmem [shape: bf16[2,768], index: 0, kind: input, shape index: {}]
  %s1 = inlined_call_operand.vmem [shape: f32[2,16], index: 1, kind: input, shape index: {}]
  %s2 = inlined_call_operand.vmem [shape: bf16[768,64], index: 2, kind: input, shape index: {}]
  %s3 = inlined_call_operand.vmem [shape: f32[16,24], index: 3, kind: input, shape index: {}]
  %s4 = inlined_call_operand.vmem [shape: f32[1,88], index: 4, kind: input, shape index: {}]
  %s5 = inlined_call_operand.hbm [shape: f32[2,8], index: 5, kind: output, shape index: {0}]
  %s6 = inlined_call_operand.hbm [shape: f32[2,16], index: 6, kind: output, shape index: {1}]
  %s7 = inlined_call_operand.hbm [shape: f32[2,16], index: 7, kind: output, shape index: {2}]
  %8 = xla_tuple %s5, %s6, %s7
  %s9 = sld [smem:[#allocation0]]
  $region46: #{drqn_forward.1} parent=0
    _
  %s11 = ssub.s32 1, %s9
  %s12 = scalar_select 0, %s11, %s9
  $region1: #{drqn_forward.1} parent=0
    #allocation2 [shape = 'u8[1024]{0}', space=vmem, size = 0x400, scoped, tag = 'output window, operand 0, single buffered']
    #allocation3 [shape = 's32[1]{0}', space=sflag, size = 0x4, scoped, tag = 'scoped memory for drqn_forward.1']
    #allocation4 [shape = 'u8[1024]{0}', space=vmem, size = 0x400, scoped, tag = 'output window, operand 1, single buffered']
    #allocation5 [shape = 's32[1]{0}', space=sflag, size = 0x4, scoped, tag = 'scoped memory for drqn_forward.1']
    #allocation6 [shape = 'u8[1024]{0}', space=vmem, size = 0x400, scoped, tag = 'output window, operand 2, single buffered']
    %13 = vsyncpa [#allocation3], 0
    %14 = vsyncpa [#allocation5], 0
    // Predicated region
    $region2: #{drqn_forward.1} parent=1 // pred_check
      _
    $region3: #{drqn_forward.1} parent=1 // pred_check_branch
      %16 = sbr.rel (0) target = $region5
    $region4: #{drqn_forward.1} parent=1 // pred_region
      _
    $region5: #{drqn_forward.1} parent=1 // pred_fallthru
      _
    // Predicated region
    $region6: #{drqn_forward.1} parent=1 // pred_check
      _
    $region7: #{drqn_forward.1} parent=1 // pred_check_branch
      %18 = sbr.rel (0) target = $region9
    $region8: #{drqn_forward.1} parent=1 // pred_region
      _
    $region9: #{drqn_forward.1} parent=1 // pred_fallthru
      _
    // Predicated region
    $region10: #{drqn_forward.1} parent=1 // pred_check
      _
    $region11: #{drqn_forward.1} parent=1 // pred_check_branch
      %20 = sbr.rel (0) target = $region13
    $region12: #{drqn_forward.1} parent=1 // pred_region
      _
    $region13: #{drqn_forward.1} parent=1 // pred_fallthru
      _
    // Predicated region
    $region14: #{drqn_forward.1} parent=1 // pred_check
      _
    $region15: #{drqn_forward.1} parent=1 // pred_check_branch
      %22 = sbr.rel (0) target = $region17
    $region16: #{drqn_forward.1} parent=1 // pred_region
      _
    $region17: #{drqn_forward.1} parent=1 // pred_fallthru
      _
    // Predicated region
    $region18: #{drqn_forward.1} parent=1 // pred_check
      _
    $region19: #{drqn_forward.1} parent=1 // pred_check_branch
      %24 = sbr.rel (0) target = $region21
    $region20: #{drqn_forward.1} parent=1 // pred_region
      _
    $region21: #{drqn_forward.1} parent=1 // pred_fallthru
      _
    %v25 = vld [vmem:[%s1] sm:$0x3]
    %v26 = vld [vmem:[%s4] sm:$0x1]
    %v27 = vld [vmem:[%s0] sm:$0x3f]
    %v28 = vld [vmem:[%s2] sm:$0xf]
    %v29 = vld [vmem:[%s2 + $0x4] sm:$0xf]
    %v30 = vld [vmem:[%s2 + $0x8] sm:$0xf]
    %v31 = vld [vmem:[%s2 + $0xc] sm:$0xf]
    %v32 = vld [vmem:[%s2 + $0x10] sm:$0xf]
    %v33 = vld [vmem:[%s2 + $0x14] sm:$0xf]
    %v34 = vld [vmem:[%s2 + $0x18] sm:$0xf]
    %v35 = vld [vmem:[%s2 + $0x1c] sm:$0xf]
    %v36 = vld [vmem:[%s2 + $0x20] sm:$0xf]
    %v37 = vld [vmem:[%s2 + $0x24] sm:$0xf]
    %v38 = vld [vmem:[%s2 + $0x28] sm:$0xf]
    %v39 = vld [vmem:[%s2 + $0x2c] sm:$0xf]
    %v40 = vld [vmem:[%s2 + $0x30] sm:$0xf]
    %v41 = vld [vmem:[%s2 + $0x34] sm:$0xf]
    %v42 = vld [vmem:[%s2 + $0x38] sm:$0xf]
    %v43 = vld [vmem:[%s2 + $0x3c] sm:$0xf]
    %v44 = vld [vmem:[%s2 + $0x40] sm:$0xf]
    %v45 = vld [vmem:[%s2 + $0x44] sm:$0xf]
    %v46 = vld [vmem:[%s2 + $0x48] sm:$0xf]
    %v47 = vld [vmem:[%s2 + $0x4c] sm:$0xf]
    %v48 = vld [vmem:[%s2 + $0x50] sm:$0xf]
    %v49 = vld [vmem:[%s2 + $0x54] sm:$0xf]
    %v50 = vld [vmem:[%s2 + $0x58] sm:$0xf]
    %v51 = vld [vmem:[%s2 + $0x5c] sm:$0xf]
    %v52 = vld [vmem:[%s2 + $0x60] sm:$0xf]
    %v53 = vld [vmem:[%s2 + $0x64] sm:$0xf]
    %v54 = vld [vmem:[%s2 + $0x68] sm:$0xf]
    %v55 = vld [vmem:[%s2 + $0x6c] sm:$0xf]
    %v56 = vld [vmem:[%s2 + $0x70] sm:$0xf]
    %v57 = vld [vmem:[%s2 + $0x74] sm:$0xf]
    %v58 = vld [vmem:[%s2 + $0x78] sm:$0xf]
    %v59 = vld [vmem:[%s2 + $0x7c] sm:$0xf]
    %v60 = vld [vmem:[%s2 + $0x80] sm:$0xf]
    %v61 = vld [vmem:[%s2 + $0x84] sm:$0xf]
    %v62 = vld [vmem:[%s2 + $0x88] sm:$0xf]
    %v63 = vld [vmem:[%s2 + $0x8c] sm:$0xf]
    %v64 = vld [vmem:[%s2 + $0x90] sm:$0xf]
    %v65 = vld [vmem:[%s2 + $0x94] sm:$0xf]
    %v66 = vld [vmem:[%s2 + $0x98] sm:$0xf]
    %v67 = vld [vmem:[%s2 + $0x9c] sm:$0xf]
    %v68 = vld [vmem:[%s2 + $0xa0] sm:$0xf]
    %v69 = vld [vmem:[%s2 + $0xa4] sm:$0xf]
    %v70 = vld [vmem:[%s2 + $0xa8] sm:$0xf]
    %v71 = vld [vmem:[%s2 + $0xac] sm:$0xf]
    %v72 = vld [vmem:[%s2 + $0xb0] sm:$0xf]
    %v73 = vld [vmem:[%s2 + $0xb4] sm:$0xf]
    %v74 = vld [vmem:[%s2 + $0xb8] sm:$0xf]
    %v75 = vld [vmem:[%s2 + $0xbc] sm:$0xf]
    %v76 = vld [vmem:[%s2 + $0xc0] sm:$0xf]
    %v77 = vld [vmem:[%s2 + $0xc4] sm:$0xf]
    %v78 = vld [vmem:[%s2 + $0xc8] sm:$0xf]
    %v79 = vld [vmem:[%s2 + $0xcc] sm:$0xf]
    %v80 = vld [vmem:[%s2 + $0xd0] sm:$0xf]
    %v81 = vld [vmem:[%s2 + $0xd4] sm:$0xf]
    %v82 = vld [vmem:[%s2 + $0xd8] sm:$0xf]
    %v83 = vld [vmem:[%s2 + $0xdc] sm:$0xf]
    %v84 = vld [vmem:[%s2 + $0xe0] sm:$0xf]
    %v85 = vld [vmem:[%s2 + $0xe4] sm:$0xf]
    %v86 = vld [vmem:[%s2 + $0xe8] sm:$0xf]
    %v87 = vld [vmem:[%s2 + $0xec] sm:$0xf]
    %v88 = vld [vmem:[%s2 + $0xf0] sm:$0xf]
    %v89 = vld [vmem:[%s2 + $0xf4] sm:$0xf]
    %v90 = vld [vmem:[%s2 + $0xf8] sm:$0xf]
    %v91 = vld [vmem:[%s2 + $0xfc] sm:$0xf]
    %v92 = vld [vmem:[%s2 + $0x100] sm:$0xf]
    %v93 = vld [vmem:[%s2 + $0x104] sm:$0xf]
    %v94 = vld [vmem:[%s2 + $0x108] sm:$0xf]
    %v95 = vld [vmem:[%s2 + $0x10c] sm:$0xf]
    %v96 = vld [vmem:[%s2 + $0x110] sm:$0xf]
    %v97 = vld [vmem:[%s2 + $0x114] sm:$0xf]
    %v98 = vld [vmem:[%s2 + $0x118] sm:$0xf]
    %v99 = vld [vmem:[%s2 + $0x11c] sm:$0xf]
    %v100 = vld [vmem:[%s2 + $0x120] sm:$0xf]
    %v101 = vld [vmem:[%s2 + $0x124] sm:$0xf]
    %v102 = vld [vmem:[%s2 + $0x128] sm:$0xf]
    %v103 = vld [vmem:[%s2 + $0x12c] sm:$0xf]
    %v104 = vld [vmem:[%s2 + $0x130] sm:$0xf]
    %v105 = vld [vmem:[%s2 + $0x134] sm:$0xf]
    %v106 = vld [vmem:[%s2 + $0x138] sm:$0xf]
    %v107 = vld [vmem:[%s2 + $0x13c] sm:$0xf]
    %v108 = vld [vmem:[%s2 + $0x140] sm:$0xf]
    %v109 = vld [vmem:[%s2 + $0x144] sm:$0xf]
    %v110 = vld [vmem:[%s2 + $0x148] sm:$0xf]
    %v111 = vld [vmem:[%s2 + $0x14c] sm:$0xf]
    %v112 = vld [vmem:[%s2 + $0x150] sm:$0xf]
    %v113 = vld [vmem:[%s2 + $0x154] sm:$0xf]
    %v114 = vld [vmem:[%s2 + $0x158] sm:$0xf]
    %v115 = vld [vmem:[%s2 + $0x15c] sm:$0xf]
    %v116 = vld [vmem:[%s2 + $0x160] sm:$0xf]
    %v117 = vld [vmem:[%s2 + $0x164] sm:$0xf]
    %v118 = vld [vmem:[%s2 + $0x168] sm:$0xf]
    %v119 = vld [vmem:[%s2 + $0x16c] sm:$0xf]
    %v120 = vld [vmem:[%s2 + $0x170] sm:$0xf]
    %v121 = vld [vmem:[%s2 + $0x174] sm:$0xf]
    %v122 = vld [vmem:[%s2 + $0x178] sm:$0xf]
    %v123 = vld [vmem:[%s2 + $0x17c] sm:$0xf]
    %v125 = vperm.slane %v26, 0
    %128 = vst [vmem:[#allocation1] ss:$9 sm:$0xff] %v27
    %v129 = vld [vmem:[#allocation1] sm:$0xff]
    %v130 = vld [vmem:[#allocation1 + $0x9] sm:$0xff]
    %v131 = vld [vmem:[#allocation1 + $0x12] sm:$0xff]
    %v132 = vld [vmem:[#allocation1 + $0x1b] sm:$0xff]
    %v133 = vld [vmem:[#allocation1 + $0x24] sm:$0xff]
    %v134 = vld [vmem:[#allocation1 + $0x2d] sm:$0xff]
    %v237 = vunpack.c.l.b16 %v28
    %v238 = vunpack.c.l.b16 %v29
    %v239 = vunpack.c.l.b16 %v30
    %v240 = vunpack.c.l.b16 %v31
    %v241 = vunpack.c.l.b16 %v32
    %v242 = vunpack.c.l.b16 %v33
    %v243 = vunpack.c.l.b16 %v34
    %v244 = vunpack.c.l.b16 %v35
    %v245 = vunpack.c.l.b16 %v36
    %v246 = vunpack.c.l.b16 %v37
    %v247 = vunpack.c.l.b16 %v38
    %v248 = vunpack.c.l.b16 %v39
    %v249 = vunpack.c.l.b16 %v40
    %v250 = vunpack.c.l.b16 %v41
    %v251 = vunpack.c.l.b16 %v42
    %v252 = vunpack.c.l.b16 %v43
    %v253 = vunpack.c.l.b16 %v44
    %v254 = vunpack.c.l.b16 %v45
    %v255 = vunpack.c.l.b16 %v46
    %v256 = vunpack.c.l.b16 %v47
    %v257 = vunpack.c.l.b16 %v48
    %v258 = vunpack.c.l.b16 %v49
    %v259 = vunpack.c.l.b16 %v50
    %v260 = vunpack.c.l.b16 %v51
    %v261 = vunpack.c.l.b16 %v52
    %v262 = vunpack.c.l.b16 %v53
    %v263 = vunpack.c.l.b16 %v54
    %v264 = vunpack.c.l.b16 %v55
    %v265 = vunpack.c.l.b16 %v56
    %v266 = vunpack.c.l.b16 %v57
    %v267 = vunpack.c.l.b16 %v58
    %v268 = vunpack.c.l.b16 %v59
    %v269 = vunpack.c.l.b16 %v60
    %v270 = vunpack.c.l.b16 %v61
    %v271 = vunpack.c.l.b16 %v62
    %v272 = vunpack.c.l.b16 %v63
    %v273 = vunpack.c.l.b16 %v64
    %v274 = vunpack.c.l.b16 %v65
    %v275 = vunpack.c.l.b16 %v66
    %v276 = vunpack.c.l.b16 %v67
    %v277 = vunpack.c.l.b16 %v68
    %v278 = vunpack.c.l.b16 %v69
    %v279 = vunpack.c.l.b16 %v70
    %v280 = vunpack.c.l.b16 %v71
    %v281 = vunpack.c.l.b16 %v72
    %v282 = vunpack.c.l.b16 %v73
    %v283 = vunpack.c.l.b16 %v74
    %v284 = vunpack.c.l.b16 %v75
    %v285 = vunpack.c.l.b16 %v76
    %v286 = vunpack.c.l.b16 %v77
    %v287 = vunpack.c.l.b16 %v78
    %v288 = vunpack.c.l.b16 %v79
    %v289 = vunpack.c.l.b16 %v80
    %v290 = vunpack.c.l.b16 %v81
    %v291 = vunpack.c.l.b16 %v82
    %v292 = vunpack.c.l.b16 %v83
    %v293 = vunpack.c.l.b16 %v84
    %v294 = vunpack.c.l.b16 %v85
    %v295 = vunpack.c.l.b16 %v86
    %v296 = vunpack.c.l.b16 %v87
    %v297 = vunpack.c.l.b16 %v88
    %v298 = vunpack.c.l.b16 %v89
    %v299 = vunpack.c.l.b16 %v90
    %v300 = vunpack.c.l.b16 %v91
    %v301 = vunpack.c.l.b16 %v92
    %v302 = vunpack.c.l.b16 %v93
    %v303 = vunpack.c.l.b16 %v94
    %v304 = vunpack.c.l.b16 %v95
    %v305 = vunpack.c.l.b16 %v96
    %v306 = vunpack.c.l.b16 %v97
    %v307 = vunpack.c.l.b16 %v98
    %v308 = vunpack.c.l.b16 %v99
    %v309 = vunpack.c.l.b16 %v100
    %v310 = vunpack.c.l.b16 %v101
    %v311 = vunpack.c.l.b16 %v102
    %v312 = vunpack.c.l.b16 %v103
    %v313 = vunpack.c.l.b16 %v104
    %v314 = vunpack.c.l.b16 %v105
    %v315 = vunpack.c.l.b16 %v106
    %v316 = vunpack.c.l.b16 %v107
    %v317 = vunpack.c.l.b16 %v108
    %v318 = vunpack.c.l.b16 %v109
    %v319 = vunpack.c.l.b16 %v110
    %v320 = vunpack.c.l.b16 %v111
    %v321 = vunpack.c.l.b16 %v112
    %v322 = vunpack.c.l.b16 %v113
    %v323 = vunpack.c.l.b16 %v114
    %v324 = vunpack.c.l.b16 %v115
    %v325 = vunpack.c.l.b16 %v116
    %v326 = vunpack.c.l.b16 %v117
    %v327 = vunpack.c.l.b16 %v118
    %v328 = vunpack.c.l.b16 %v119
    %v329 = vunpack.c.l.b16 %v120
    %v330 = vunpack.c.l.b16 %v121
    %v331 = vunpack.c.l.b16 %v122
    %v332 = vunpack.c.l.b16 %v123
    %v333 = vpack.c.b16 %v238, %v237
    %v334 = vpack.c.b16 %v240, %v239
    %v335 = vpack.c.b16 %v242, %v241
    %v336 = vpack.c.b16 %v244, %v243
    %v337 = vpack.c.b16 %v246, %v245
    %v338 = vpack.c.b16 %v248, %v247
    %v339 = vpack.c.b16 %v250, %v249
    %v340 = vpack.c.b16 %v252, %v251
    %v341 = vpack.c.b16 %v254, %v253
    %v342 = vpack.c.b16 %v256, %v255
    %v343 = vpack.c.b16 %v258, %v257
    %v344 = vpack.c.b16 %v260, %v259
    %v345 = vpack.c.b16 %v262, %v261
    %v346 = vpack.c.b16 %v264, %v263
    %v347 = vpack.c.b16 %v266, %v265
    %v348 = vpack.c.b16 %v268, %v267
    %v349 = vpack.c.b16 %v270, %v269
    %v350 = vpack.c.b16 %v272, %v271
    %v351 = vpack.c.b16 %v274, %v273
    %v352 = vpack.c.b16 %v276, %v275
    %v353 = vpack.c.b16 %v278, %v277
    %v354 = vpack.c.b16 %v280, %v279
    %v355 = vpack.c.b16 %v282, %v281
    %v356 = vpack.c.b16 %v284, %v283
    %v357 = vpack.c.b16 %v286, %v285
    %v358 = vpack.c.b16 %v288, %v287
    %v359 = vpack.c.b16 %v290, %v289
    %v360 = vpack.c.b16 %v292, %v291
    %v361 = vpack.c.b16 %v294, %v293
    %v362 = vpack.c.b16 %v296, %v295
    %v363 = vpack.c.b16 %v298, %v297
    %v364 = vpack.c.b16 %v300, %v299
    %v365 = vpack.c.b16 %v302, %v301
    %v366 = vpack.c.b16 %v304, %v303
    %v367 = vpack.c.b16 %v306, %v305
    %v368 = vpack.c.b16 %v308, %v307
    %v369 = vpack.c.b16 %v310, %v309
    %v370 = vpack.c.b16 %v312, %v311
    %v371 = vpack.c.b16 %v314, %v313
    %v372 = vpack.c.b16 %v316, %v315
    %v373 = vpack.c.b16 %v318, %v317
    %v374 = vpack.c.b16 %v320, %v319
    %v375 = vpack.c.b16 %v322, %v321
    %v376 = vpack.c.b16 %v324, %v323
    %v377 = vpack.c.b16 %v326, %v325
    %v378 = vpack.c.b16 %v328, %v327
    %v379 = vpack.c.b16 %v330, %v329
    %v380 = vpack.c.b16 %v332, %v331
    %429 = vmatpush.bf16.msra.mxu0 %v340
    %430 = vmatpush.bf16.msra.mxu0 %v339
    %431 = vmatpush.bf16.msra.mxu0 %v338
    %432 = vmatpush.bf16.msra.mxu0 %v337
    %433 = vmatpush.bf16.msra.mxu0 %v336
    %434 = vmatpush.bf16.msra.mxu0 %v335
    %435 = vmatpush.bf16.msra.mxu0 %v334
    %436 = vmatpush.bf16.msra.mxu0 %v333
    %437 = vmatmul.bf16.gmra.mxu0 %v129
    %v438 = vpop.f32.mrf.mxu0
    %v439 = vadd.f32 %v125, %v438
    %v440 = vpop.f32.mrf.mxu0
    %441 = vdwg.mxu0
    %442 = vmatpush.bf16.msra.mxu0 %v348
    %443 = vmatpush.bf16.msra.mxu0 %v347
    %444 = vmatpush.bf16.msra.mxu0 %v346
    %445 = vmatpush.bf16.msra.mxu0 %v345
    %446 = vmatpush.bf16.msra.mxu0 %v344
    %447 = vmatpush.bf16.msra.mxu0 %v343
    %448 = vmatpush.bf16.msra.mxu0 %v342
    %449 = vmatpush.bf16.msra.mxu0 %v341
    %450 = vmatmul.bf16.gmra.mxu0 %v130
    %v451 = vpop.f32.mrf.mxu0
    %v452 = vadd.f32 %v439, %v451
    %v453 = vpop.f32.mrf.mxu0
    %454 = vdwg.mxu0
    %455 = vmatpush.bf16.msra.mxu0 %v356
    %456 = vmatpush.bf16.msra.mxu0 %v355
    %457 = vmatpush.bf16.msra.mxu0 %v354
    %458 = vmatpush.bf16.msra.mxu0 %v353
    %459 = vmatpush.bf16.msra.mxu0 %v352
    %460 = vmatpush.bf16.msra.mxu0 %v351
    %461 = vmatpush.bf16.msra.mxu0 %v350
    %462 = vmatpush.bf16.msra.mxu0 %v349
    %463 = vmatmul.bf16.gmra.mxu0 %v131
    %v464 = vpop.f32.mrf.mxu0
    %v465 = vadd.f32 %v452, %v464
    %v466 = vpop.f32.mrf.mxu0
    %467 = vdwg.mxu0
    %468 = vmatpush.bf16.msra.mxu0 %v364
    %469 = vmatpush.bf16.msra.mxu0 %v363
    %470 = vmatpush.bf16.msra.mxu0 %v362
    %471 = vmatpush.bf16.msra.mxu0 %v361
    %472 = vmatpush.bf16.msra.mxu0 %v360
    %473 = vmatpush.bf16.msra.mxu0 %v359
    %474 = vmatpush.bf16.msra.mxu0 %v358
    %475 = vmatpush.bf16.msra.mxu0 %v357
    %476 = vmatmul.bf16.gmra.mxu0 %v132
    %v477 = vpop.f32.mrf.mxu0
    %v478 = vadd.f32 %v465, %v477
    %v479 = vpop.f32.mrf.mxu0
    %480 = vdwg.mxu0
    %481 = vmatpush.bf16.msra.mxu0 %v372
    %482 = vmatpush.bf16.msra.mxu0 %v371
    %483 = vmatpush.bf16.msra.mxu0 %v370
    %484 = vmatpush.bf16.msra.mxu0 %v369
    %485 = vmatpush.bf16.msra.mxu0 %v368
    %486 = vmatpush.bf16.msra.mxu0 %v367
    %487 = vmatpush.bf16.msra.mxu0 %v366
    %488 = vmatpush.bf16.msra.mxu0 %v365
    %489 = vmatmul.bf16.gmra.mxu0 %v133
    %v490 = vpop.f32.mrf.mxu0
    %v491 = vadd.f32 %v478, %v490
    %v492 = vpop.f32.mrf.mxu0
    %493 = vdwg.mxu0
    %494 = vmatpush.bf16.msra.mxu0 %v380
    %495 = vmatpush.bf16.msra.mxu0 %v379
    %496 = vmatpush.bf16.msra.mxu0 %v378
    %497 = vmatpush.bf16.msra.mxu0 %v377
    %498 = vmatpush.bf16.msra.mxu0 %v376
    %499 = vmatpush.bf16.msra.mxu0 %v375
    %500 = vmatpush.bf16.msra.mxu0 %v374
    %501 = vmatpush.bf16.msra.mxu0 %v373
    %502 = vmatmul.bf16.gmra.mxu0 %v134
    %v503 = vpop.f32.mrf.mxu0
    %v504 = vadd.f32 %v491, %v503
    %v505 = vpop.f32.mrf.mxu0
    %506 = vdwg.mxu0
    %v507 = vxor.u32 %v504, 2147483648
    %v508 = vmul.f32 %v507, 1.442695
    %v509 = vpow.pop %v508
    %v510 = vadd.f32 %v509, 1.0
    %v511 = vrcp.pop %v510
    %v512 = vmul.f32 %v510, %v511
    %v513 = vsub.f32 1.0, %v512
    %v514 = vmul.f32 %v511, %v513
    %v515 = vadd.f32 %v511, %v514
    %vm516 = vweird.f32 %v510
    %vm517 = vweird.f32 %v511
    %vm518 = vmor %vm516, %vm517
    %v519 = vsel %vm518, %v511, %v515
    %v520 = vand.u32 2147483647, %v510
    %vm521 = vcmp.eq.f32.partialorder %v520, 8.507059e+37
    %v522 = vand.u32 %v510, 2147483648
    %v523 = vor.u32 1.1754944e-38, %v522
    %v524 = vsel %vm521, %v523, %v519
    %v525 = vmul.f32 1.0, %v524
    %v526 = vmul.f32 %v525, 2.0
    %v527 = vsub.f32 %v526, 1.0
    %529 = vrot.lane.b32.xlu0 %v25, 16
    %v530 = vpop.permute.xlu0 %529
    %v532 = vmul.f32 %v525, %v530
    %534 = vrot.lane.b32.xlu0 %v527, 80
    %v535 = vpop.permute.xlu0 %534
    %v537 = vmul.f32 %v525, %v535
    %539 = vrot.lane.b32.xlu0 %v537, 16
    %v540 = vpop.permute.xlu0 %539
    %v542 = vadd.f32 %v532, %v540
    %v543 = vtanh.pop %v542
    %545 = vrot.lane.b32.xlu0 %v543, 16
    %v546 = vpop.permute.xlu0 %545
    %v548 = vmul.f32 %v525, %v546
    %v549 = vld [vmem:[%s3] sm:$0xff]
    %v550 = vld [vmem:[%s3 + $0x8] sm:$0xff]
    %552 = vrot.lane.b32.xlu0 %v548, 96
    %v553 = vpop.permute.xlu0 %552
    %554 = vrot.lane.b32.xlu0 %v125, 64
    %v555 = vpop.permute.xlu0 %554
    %vm557 = vcmask 130048
    %v558 = vsel %vm557, %v553, 0
    %560 = vmatpush.msra.mxu0 0.0
    %561 = vmatpush.msra.mxu0 0.0
    %562 = vmatpush.msra.mxu0 0.0
    %563 = vmatpush.msra.mxu0 0.0
    %564 = vmatpush.msra.mxu0 0.0
    %565 = vmatpush.msra.mxu0 0.0
    %566 = vmatpush.msra.mxu0 0.0
    %567 = vmatpush.msra.mxu0 0.0
    %568 = vmatpush.msra.mxu0 0.0
    %569 = vmatpush.msra.mxu0 0.0
    %570 = vmatpush.msra.mxu0 0.0
    %571 = vmatpush.msra.mxu0 0.0
    %572 = vmatpush.msra.mxu0 0.0
    %573 = vmatpush.msra.mxu0 0.0
    %574 = vmatpush.msra.mxu0 %v550
    %575 = vmatpush.msra.mxu0 %v549
    %576 = vmatmul.f32.gmra.mxu0 %v558
    %v577 = vpop.f32.mrf.mxu0
    %v578 = vadd.f32 %v555, %v577
    %579 = vdwg.mxu0
    %v580 = vmax.f32 %v578, 0.0
    %583 = vrot.lane.b32.xlu0 %v549, 112
    %v584 = vpop.permute.xlu0 %583
    %585 = vrot.lane.b32.xlu0 %v550, 112
    %v586 = vpop.permute.xlu0 %585
    %589 = vrot.lane.b32.xlu0 %v125, 48
    %v590 = vpop.permute.xlu0 %589
    %v593 = vsel %vm557, %v580, 0
    %595 = vmatpush.msra.mxu0 0.0
    %596 = vmatpush.msra.mxu0 0.0
    %597 = vmatpush.msra.mxu0 0.0
    %598 = vmatpush.msra.mxu0 0.0
    %599 = vmatpush.msra.mxu0 0.0
    %600 = vmatpush.msra.mxu0 0.0
    %601 = vmatpush.msra.mxu0 0.0
    %602 = vmatpush.msra.mxu0 0.0
    %603 = vmatpush.msra.mxu0 0.0
    %604 = vmatpush.msra.mxu0 0.0
    %605 = vmatpush.msra.mxu0 0.0
    %606 = vmatpush.msra.mxu0 0.0
    %607 = vmatpush.msra.mxu0 0.0
    %608 = vmatpush.msra.mxu0 0.0
    %609 = vmatpush.msra.mxu0 %v586
    %610 = vmatpush.msra.mxu0 %v584
    %611 = vmatmul.f32.gmra.mxu0 %v593
    %v612 = vpop.f32.mrf.mxu0
    %v613 = vadd.f32 %v590, %v612
    %614 = vdwg.mxu0
    %vm615 = vcmask 58368
    %616 = vst.msk [vmem:[#allocation2] sm:$0x3] %vm615, %v613
    %vm618 = vcmask 123904
    %619 = vst.msk [vmem:[#allocation4] sm:$0x3] %vm618, %v553
    %621 = vrot.lane.b32.xlu0 %v542, 112
    %v622 = vpop.permute.xlu0 %621
    %624 = vst.msk [vmem:[#allocation6] sm:$0x3] %vm618, %v622
    // Predicated region
    $region22: #{drqn_forward.1} parent=1 // pred_check
      _
    $region23: #{drqn_forward.1} parent=1 // pred_check_branch
      %626 = sbr.rel (0) target = $region25
    $region24: #{drqn_forward.1} parent=1 // pred_region
      %628 = vsyncadd [#allocation3], 0
      %s630 = sshll.u32 [#allocation2], 4
      %s631 = int_to_ptr.vmem [resolvable:$true] %s630
      %s632 = sshll.u32 %s5, 4
      %s633 = int_to_ptr.hbm [resolvable:$true] %s632
      %635 = dma.vmem_to_hbm [thread:$0]  %s631, 32, %s633, [#allocation3]
    $region25: #{drqn_forward.1} parent=1 // pred_fallthru
      _
    // Predicated region
    $region26: #{drqn_forward.1} parent=1 // pred_check
      _
    $region27: #{drqn_forward.1} parent=1 // pred_check_branch
      %637 = sbr.rel (0) target = $region29
    $region28: #{drqn_forward.1} parent=1 // pred_region
      %639 = vsyncadd [#allocation5], 0
      %s641 = sshll.u32 [#allocation4], 4
      %s642 = int_to_ptr.vmem [resolvable:$true] %s641
      %s643 = sshll.u32 %s6, 4
      %s644 = int_to_ptr.hbm [resolvable:$true] %s643
      %646 = dma.vmem_to_hbm [thread:$0]  %s642, 32, %s644, [#allocation5]
    $region29: #{drqn_forward.1} parent=1 // pred_fallthru
      _
    // Predicated region
    $region30: #{drqn_forward.1} parent=1 // pred_check
      _
    $region31: #{drqn_forward.1} parent=1 // pred_check_branch
      %648 = sbr.rel (0) target = $region33
    $region32: #{drqn_forward.1} parent=1 // pred_region
      %650 = vsyncadd [#allocation5], 0
      %s652 = sshll.u32 [#allocation6], 4
      %s653 = int_to_ptr.vmem [resolvable:$true] %s652
      %s654 = sshll.u32 %s7, 4
      %s655 = int_to_ptr.hbm [resolvable:$true] %s654
      %657 = dma.vmem_to_hbm [thread:$0]  %s653, 32, %s655, [#allocation5]
    $region33: #{drqn_forward.1} parent=1 // pred_fallthru
      _
    // Predicated region
    $region34: #{drqn_forward.1} parent=1 // pred_check
      _
    $region35: #{drqn_forward.1} parent=1 // pred_check_branch
      %659 = sbr.rel (0) target = $region37
    $region36: #{drqn_forward.1} parent=1 // pred_region
      %661 = dma.done [#allocation3], 32
    $region37: #{drqn_forward.1} parent=1 // pred_fallthru
      _
    // Predicated region
    $region38: #{drqn_forward.1} parent=1 // pred_check
      _
    $region39: #{drqn_forward.1} parent=1 // pred_check_branch
      %663 = sbr.rel (0) target = $region41
    $region40: #{drqn_forward.1} parent=1 // pred_region
      %665 = dma.done [#allocation5], 32
    $region41: #{drqn_forward.1} parent=1 // pred_fallthru
      _
    // Predicated region
    $region42: #{drqn_forward.1} parent=1 // pred_check
      _
    $region43: #{drqn_forward.1} parent=1 // pred_check_branch
      %667 = sbr.rel (0) target = $region45
    $region44: #{drqn_forward.1} parent=1 // pred_region
      %669 = dma.done [#allocation5], 32
    $region45: #{drqn_forward.1} parent=1 // pred_fallthru
      _
    %670 = vsyncpa [#allocation3], 1
    %671 = vsyncpa [#allocation5], 1

</llo_original>
